<compile_context>
chip_gen: v7x
topology: tpu7x:2x2x1
jax: 0.10.0
libtpu: 0.0.40
codegen_flags: <defaults>
</compile_context>

<pallas_src>
import jax
import jax.numpy as jnp
from jax.experimental import pallas as pl
from jax.experimental.pallas import tpu as pltpu

# torch.topk(x_view, 12, dim=1) is computed in MVCNN, but DSCMR only uses
# x_sort[:, 1, :] (fc2) and x_sort[:, 3, :] (fc4) -> only need ranks 0..3.
TOPK_RANKS_NEEDED = 4


def dscmr_kernel(x_ref, w1_ref, b1_ref, w2_ref, b2_ref, w3_ref, b3_ref,
                 p1_ref, p2_ref, f1_ref, f2_ref):
    B, V, D = x_ref.shape

    # --- streaming top-4 over the view axis (VPU-only insertion network) ---
    # Maintain t[0] >= t[1] >= t[2] >= t[3] per (b, d) and insert each view
    # with max/min pairs.  Reproduces torch.topk values (duplicates kept).
    # NOTE: assumes finite inputs (no NaN / -inf), like normal activations.
    neg_inf = jnp.full((B, D), -jnp.inf, dtype=jnp.float32)
    t = [neg_inf, neg_inf, neg_inf, neg_inf]
    for v in range(V):                                 # unrolled, V is static
        xv = x_ref[:, v, :].astype(jnp.float32)        # (B, D); no-op for f32
        for r in range(TOPK_RANKS_NEEDED):
            hi = jnp.maximum(t[r], xv)
            xv = jnp.minimum(t[r], xv)
            t[r] = hi
    fc2 = t[1]                                         # x_sort[:, 1, :]
    fc4 = t[3]                                         # x_sort[:, 3, :]

    # --- fused DSCMR head: both branches share weights -> one matmul chain --
    M = 2 * B
    M_pad = ((M + 7) // 8) * 8                         # fill sublanes
    pieces = [fc2, fc4]
    if M_pad > M:
        pieces.append(jnp.zeros((M_pad - M, D), jnp.float32))
    fc = jnp.concatenate(pieces, axis=0)               # (M_pad, D)

    w1 = w1_ref[...]; b1 = b1_ref[...]
    w2 = w2_ref[...]; b2 = b2_ref[...]
    w3 = w3_ref[...]; b3 = b3_ref[...]                 # lane-padded already

    h = jnp.dot(fc, w1, preferred_element_type=jnp.float32) + b1   # denseL1
    h = jnp.maximum(h, 0.0)                                        # ReLU
    f = jnp.dot(h, w2, preferred_element_type=jnp.float32) + b2    # linearLayer
    p = jnp.dot(f, w3, preferred_element_type=jnp.float32) + b3    # linearLayer2

    f1_ref[...] = f[:B].astype(f1_ref.dtype)
    f2_ref[...] = f[B:2 * B].astype(f2_ref.dtype)
    p1_ref[...] = p[:B].astype(p1_ref.dtype)
    p2_ref[...] = p[B:2 * B].astype(p2_ref.dtype)


@jax.jit
def dscmr_forward(x_view, w1, b1, w2, b2, w3, b3):
    B, V, D = x_view.shape
    H = w1.shape[1]
    O = w3.shape[1]

    # Lane-dense logits: pad last-layer output dim to a multiple of 128.
    O_pad = max(128, ((O + 127) // 128) * 128)
    w3p = jnp.pad(w3, ((0, 0), (0, O_pad - O)))
    b3p = jnp.pad(b3.reshape(1, O), ((0, 0), (0, O_pad - O)))

    vmem = pl.BlockSpec(memory_space=pltpu.MemorySpace.VMEM)

    # Explicit VMEM budget: all operands resident (grid-less), with headroom.
    def nbytes(a):
        return a.size * a.dtype.itemsize
    est = sum(nbytes(a) for a in (x_view, w1, b1, w2, b2, w3p, b3p))
    est += (2 * B * O_pad + 2 * B * H) * 4             # outputs (f32)
    vmem_limit = int(min(64 << 20, max(32 << 20, 2 * est)))

    p1p, p2p, f1, f2 = pl.pallas_call(
        dscmr_kernel,
        out_shape=(
            jax.ShapeDtypeStruct((B, O_pad), jnp.float32),   # predict1 (padded)
            jax.ShapeDtypeStruct((B, O_pad), jnp.float32),   # predict2 (padded)
            jax.ShapeDtypeStruct((B, H), jnp.float32),       # fc_feature1
            jax.ShapeDtypeStruct((B, H), jnp.float32),       # fc_feature2
        ),
        in_specs=[vmem] * 7,
        out_specs=(vmem, vmem, vmem, vmem),
        compiler_params=pltpu.CompilerParams(vmem_limit_bytes=vmem_limit),
    )(x_view, w1, b1, w2, b2, w3p, b3p)

    # Slice the lane-padded logits back to the true class count.
    return p1p[:, :O], p2p[:, :O], f1, f2


def ref_forward(x_view, w1, b1, w2, b2, w3, b3):
    """Plain-JAX reference for correctness checking."""
    x_sort = -jnp.sort(-x_view, axis=1)            # descending topk values
    fc2 = x_sort[:, 1, :]
    fc4 = x_sort[:, 3, :]

    def head(fc):
        h = jnp.maximum(fc @ w1 + b1, 0.0)
        f = h @ w2 + b2
        p = f @ w3 + b3
        return f, p

    f1, p1 = head(fc2)
    f2, p2 = head(fc4)
    return p1, p2, f1, f2


if __name__ == "__main__":
    # Small shapes consistent with the module's structure:
    #   B=2 batches, V=12 views (total_layers=12), D=256 per-view feature dim
    #   (stand-in for input_dim=4096), H=128 hidden (stand-in for 2048),
    #   O=40 classes (output_dim=40).
    B, V, D, H, O = 2, 12, 256, 128, 40

    key = jax.random.PRNGKey(0)
    ks = jax.random.split(key, 7)
    x_view = jax.random.normal(ks[0], (B, V, D), jnp.float32)
    w1 = jax.random.normal(ks[1], (D, H), jnp.float32) * 0.02   # denseL1
    b1 = jax.random.normal(ks[2], (1, H), jnp.float32) * 0.02
    w2 = jax.random.normal(ks[3], (H, H), jnp.float32) * 0.02   # linearLayer
    b2 = jax.random.normal(ks[4], (1, H), jnp.float32) * 0.02
    w3 = jax.random.normal(ks[5], (H, O), jnp.float32) * 0.02   # linearLayer2
    b3 = jax.random.normal(ks[6], (1, O), jnp.float32) * 0.02

    out = dscmr_forward(x_view, w1, b1, w2, b2, w3, b3)
    out = jax.block_until_ready(out)

    ref = ref_forward(x_view, w1, b1, w2, b2, w3, b3)
    for got, want in zip(out, ref):
        assert got.shape == want.shape and got.dtype == want.dtype
        assert jnp.allclose(got, want, atol=1e-4, rtol=1e-4), "mismatch vs reference"

    print("KERNEL_OK")
</pallas_src>

<mosaic_0001>
module attributes {stable_mosaic.version = 11 : i64} {
  func.func @dscmr_kernel(%arg0: memref<2x12x256xf32, #tpu.memory_space<vmem>>, %arg1: memref<256x128xf32, #tpu.memory_space<vmem>>, %arg2: memref<1x128xf32, #tpu.memory_space<vmem>>, %arg3: memref<128x128xf32, #tpu.memory_space<vmem>>, %arg4: memref<1x128xf32, #tpu.memory_space<vmem>>, %arg5: memref<128x128xf32, #tpu.memory_space<vmem>>, %arg6: memref<1x128xf32, #tpu.memory_space<vmem>>, %arg7: memref<2x128xf32, #tpu.memory_space<vmem>>, %arg8: memref<2x128xf32, #tpu.memory_space<vmem>>, %arg9: memref<2x128xf32, #tpu.memory_space<vmem>>, %arg10: memref<2x128xf32, #tpu.memory_space<vmem>>) attributes {dimension_semantics = [], scalar_prefetch = 0 : i64, scratch_operands = 0 : i64, tpu.core_type = #tpu.core_type<tc>} {
    %cst = arith.constant 0xFF800000 : f32
    %0 = vector.broadcast %cst : f32 to vector<2x256xf32>
    %c0 = arith.constant 0 : index
    %c0_0 = arith.constant 0 : index
    %c0_1 = arith.constant 0 : index
    %1 = vector.load %arg0[%c0, %c0_0, %c0_1] : memref<2x12x256xf32, #tpu.memory_space<vmem>>, vector<2x1x256xf32>
    %2 = vector.shape_cast %1 : vector<2x1x256xf32> to vector<2x256xf32>
    %3 = arith.maximumf %0, %2 : vector<2x256xf32>
    %4 = arith.minimumf %0, %2 : vector<2x256xf32>
    %5 = arith.maximumf %0, %4 : vector<2x256xf32>
    %6 = arith.minimumf %0, %4 : vector<2x256xf32>
    %7 = arith.maximumf %0, %6 : vector<2x256xf32>
    %8 = arith.minimumf %0, %6 : vector<2x256xf32>
    %9 = arith.maximumf %0, %8 : vector<2x256xf32>
    %c0_2 = arith.constant 0 : index
    %c1 = arith.constant 1 : index
    %c0_3 = arith.constant 0 : index
    %10 = vector.load %arg0[%c0_2, %c1, %c0_3] : memref<2x12x256xf32, #tpu.memory_space<vmem>>, vector<2x1x256xf32>
    %11 = vector.shape_cast %10 : vector<2x1x256xf32> to vector<2x256xf32>
    %12 = arith.maximumf %3, %11 : vector<2x256xf32>
    %13 = arith.minimumf %3, %11 : vector<2x256xf32>
    %14 = arith.maximumf %5, %13 : vector<2x256xf32>
    %15 = arith.minimumf %5, %13 : vector<2x256xf32>
    %16 = arith.maximumf %7, %15 : vector<2x256xf32>
    %17 = arith.minimumf %7, %15 : vector<2x256xf32>
    %18 = arith.maximumf %9, %17 : vector<2x256xf32>
    %c0_4 = arith.constant 0 : index
    %c2 = arith.constant 2 : index
    %c0_5 = arith.constant 0 : index
    %19 = vector.load %arg0[%c0_4, %c2, %c0_5] : memref<2x12x256xf32, #tpu.memory_space<vmem>>, vector<2x1x256xf32>
    %20 = vector.shape_cast %19 : vector<2x1x256xf32> to vector<2x256xf32>
    %21 = arith.maximumf %12, %20 : vector<2x256xf32>
    %22 = arith.minimumf %12, %20 : vector<2x256xf32>
    %23 = arith.maximumf %14, %22 : vector<2x256xf32>
    %24 = arith.minimumf %14, %22 : vector<2x256xf32>
    %25 = arith.maximumf %16, %24 : vector<2x256xf32>
    %26 = arith.minimumf %16, %24 : vector<2x256xf32>
    %27 = arith.maximumf %18, %26 : vector<2x256xf32>
    %c0_6 = arith.constant 0 : index
    %c3 = arith.constant 3 : index
    %c0_7 = arith.constant 0 : index
    %28 = vector.load %arg0[%c0_6, %c3, %c0_7] : memref<2x12x256xf32, #tpu.memory_space<vmem>>, vector<2x1x256xf32>
    %29 = vector.shape_cast %28 : vector<2x1x256xf32> to vector<2x256xf32>
    %30 = arith.maximumf %21, %29 : vector<2x256xf32>
    %31 = arith.minimumf %21, %29 : vector<2x256xf32>
    %32 = arith.maximumf %23, %31 : vector<2x256xf32>
    %33 = arith.minimumf %23, %31 : vector<2x256xf32>
    %34 = arith.maximumf %25, %33 : vector<2x256xf32>
    %35 = arith.minimumf %25, %33 : vector<2x256xf32>
    %36 = arith.maximumf %27, %35 : vector<2x256xf32>
    %c0_8 = arith.constant 0 : index
    %c4 = arith.constant 4 : index
    %c0_9 = arith.constant 0 : index
    %37 = vector.load %arg0[%c0_8, %c4, %c0_9] : memref<2x12x256xf32, #tpu.memory_space<vmem>>, vector<2x1x256xf32>
    %38 = vector.shape_cast %37 : vector<2x1x256xf32> to vector<2x256xf32>
    %39 = arith.maximumf %30, %38 : vector<2x256xf32>
    %40 = arith.minimumf %30, %38 : vector<2x256xf32>
    %41 = arith.maximumf %32, %40 : vector<2x256xf32>
    %42 = arith.minimumf %32, %40 : vector<2x256xf32>
    %43 = arith.maximumf %34, %42 : vector<2x256xf32>
    %44 = arith.minimumf %34, %42 : vector<2x256xf32>
    %45 = arith.maximumf %36, %44 : vector<2x256xf32>
    %c0_10 = arith.constant 0 : index
    %c5 = arith.constant 5 : index
    %c0_11 = arith.constant 0 : index
    %46 = vector.load %arg0[%c0_10, %c5, %c0_11] : memref<2x12x256xf32, #tpu.memory_space<vmem>>, vector<2x1x256xf32>
    %47 = vector.shape_cast %46 : vector<2x1x256xf32> to vector<2x256xf32>
    %48 = arith.maximumf %39, %47 : vector<2x256xf32>
    %49 = arith.minimumf %39, %47 : vector<2x256xf32>
    %50 = arith.maximumf %41, %49 : vector<2x256xf32>
    %51 = arith.minimumf %41, %49 : vector<2x256xf32>
    %52 = arith.maximumf %43, %51 : vector<2x256xf32>
    %53 = arith.minimumf %43, %51 : vector<2x256xf32>
    %54 = arith.maximumf %45, %53 : vector<2x256xf32>
    %c0_12 = arith.constant 0 : index
    %c6 = arith.constant 6 : index
    %c0_13 = arith.constant 0 : index
    %55 = vector.load %arg0[%c0_12, %c6, %c0_13] : memref<2x12x256xf32, #tpu.memory_space<vmem>>, vector<2x1x256xf32>
    %56 = vector.shape_cast %55 : vector<2x1x256xf32> to vector<2x256xf32>
    %57 = arith.maximumf %48, %56 : vector<2x256xf32>
    %58 = arith.minimumf %48, %56 : vector<2x256xf32>
    %59 = arith.maximumf %50, %58 : vector<2x256xf32>
    %60 = arith.minimumf %50, %58 : vector<2x256xf32>
    %61 = arith.maximumf %52, %60 : vector<2x256xf32>
    %62 = arith.minimumf %52, %60 : vector<2x256xf32>
    %63 = arith.maximumf %54, %62 : vector<2x256xf32>
    %c0_14 = arith.constant 0 : index
    %c7 = arith.constant 7 : index
    %c0_15 = arith.constant 0 : index
    %64 = vector.load %arg0[%c0_14, %c7, %c0_15] : memref<2x12x256xf32, #tpu.memory_space<vmem>>, vector<2x1x256xf32>
    %65 = vector.shape_cast %64 : vector<2x1x256xf32> to vector<2x256xf32>
    %66 = arith.maximumf %57, %65 : vector<2x256xf32>
    %67 = arith.minimumf %57, %65 : vector<2x256xf32>
    %68 = arith.maximumf %59, %67 : vector<2x256xf32>
    %69 = arith.minimumf %59, %67 : vector<2x256xf32>
    %70 = arith.maximumf %61, %69 : vector<2x256xf32>
    %71 = arith.minimumf %61, %69 : vector<2x256xf32>
    %72 = arith.maximumf %63, %71 : vector<2x256xf32>
    %c0_16 = arith.constant 0 : index
    %c8 = arith.constant 8 : index
    %c0_17 = arith.constant 0 : index
    %73 = vector.load %arg0[%c0_16, %c8, %c0_17] : memref<2x12x256xf32, #tpu.memory_space<vmem>>, vector<2x1x256xf32>
    %74 = vector.shape_cast %73 : vector<2x1x256xf32> to vector<2x256xf32>
    %75 = arith.maximumf %66, %74 : vector<2x256xf32>
    %76 = arith.minimumf %66, %74 : vector<2x256xf32>
    %77 = arith.maximumf %68, %76 : vector<2x256xf32>
    %78 = arith.minimumf %68, %76 : vector<2x256xf32>
    %79 = arith.maximumf %70, %78 : vector<2x256xf32>
    %80 = arith.minimumf %70, %78 : vector<2x256xf32>
    %81 = arith.maximumf %72, %80 : vector<2x256xf32>
    %c0_18 = arith.constant 0 : index
    %c9 = arith.constant 9 : index
    %c0_19 = arith.constant 0 : index
    %82 = vector.load %arg0[%c0_18, %c9, %c0_19] : memref<2x12x256xf32, #tpu.memory_space<vmem>>, vector<2x1x256xf32>
    %83 = vector.shape_cast %82 : vector<2x1x256xf32> to vector<2x256xf32>
    %84 = arith.maximumf %75, %83 : vector<2x256xf32>
    %85 = arith.minimumf %75, %83 : vector<2x256xf32>
    %86 = arith.maximumf %77, %85 : vector<2x256xf32>
    %87 = arith.minimumf %77, %85 : vector<2x256xf32>
    %88 = arith.maximumf %79, %87 : vector<2x256xf32>
    %89 = arith.minimumf %79, %87 : vector<2x256xf32>
    %90 = arith.maximumf %81, %89 : vector<2x256xf32>
    %c0_20 = arith.constant 0 : index
    %c10 = arith.constant 10 : index
    %c0_21 = arith.constant 0 : index
    %91 = vector.load %arg0[%c0_20, %c10, %c0_21] : memref<2x12x256xf32, #tpu.memory_space<vmem>>, vector<2x1x256xf32>
    %92 = vector.shape_cast %91 : vector<2x1x256xf32> to vector<2x256xf32>
    %93 = arith.maximumf %84, %92 : vector<2x256xf32>
    %94 = arith.minimumf %84, %92 : vector<2x256xf32>
    %95 = arith.maximumf %86, %94 : vector<2x256xf32>
    %96 = arith.minimumf %86, %94 : vector<2x256xf32>
    %97 = arith.maximumf %88, %96 : vector<2x256xf32>
    %98 = arith.minimumf %88, %96 : vector<2x256xf32>
    %99 = arith.maximumf %90, %98 : vector<2x256xf32>
    %c0_22 = arith.constant 0 : index
    %c11 = arith.constant 11 : index
    %c0_23 = arith.constant 0 : index
    %100 = vector.load %arg0[%c0_22, %c11, %c0_23] : memref<2x12x256xf32, #tpu.memory_space<vmem>>, vector<2x1x256xf32>
    %101 = vector.shape_cast %100 : vector<2x1x256xf32> to vector<2x256xf32>
    %102 = arith.minimumf %93, %101 : vector<2x256xf32>
    %103 = arith.maximumf %95, %102 : vector<2x256xf32>
    %104 = arith.minimumf %95, %102 : vector<2x256xf32>
    %105 = arith.minimumf %97, %104 : vector<2x256xf32>
    %106 = arith.maximumf %99, %105 : vector<2x256xf32>
    %cst_24 = arith.constant 0.000000e+00 : f32
    %107 = vector.broadcast %cst_24 : f32 to vector<4x256xf32>
    %108 = tpu.concatenate %103, %106, %107 in 0 : vector<2x256xf32>, vector<2x256xf32>, vector<4x256xf32> -> vector<8x256xf32>
    %c0_25 = arith.constant 0 : index
    %c0_26 = arith.constant 0 : index
    %109 = vector.load %arg1[%c0_25, %c0_26] : memref<256x128xf32, #tpu.memory_space<vmem>>, vector<256x128xf32>
    %c0_27 = arith.constant 0 : index
    %c0_28 = arith.constant 0 : index
    %110 = vector.load %arg2[%c0_27, %c0_28] : memref<1x128xf32, #tpu.memory_space<vmem>>, vector<1x128xf32>
    %c0_29 = arith.constant 0 : index
    %c0_30 = arith.constant 0 : index
    %111 = vector.load %arg3[%c0_29, %c0_30] : memref<128x128xf32, #tpu.memory_space<vmem>>, vector<128x128xf32>
    %c0_31 = arith.constant 0 : index
    %c0_32 = arith.constant 0 : index
    %112 = vector.load %arg4[%c0_31, %c0_32] : memref<1x128xf32, #tpu.memory_space<vmem>>, vector<1x128xf32>
    %c0_33 = arith.constant 0 : index
    %c0_34 = arith.constant 0 : index
    %113 = vector.load %arg5[%c0_33, %c0_34] : memref<128x128xf32, #tpu.memory_space<vmem>>, vector<128x128xf32>
    %c0_35 = arith.constant 0 : index
    %c0_36 = arith.constant 0 : index
    %114 = vector.load %arg6[%c0_35, %c0_36] : memref<1x128xf32, #tpu.memory_space<vmem>>, vector<1x128xf32>
    %cst_37 = arith.constant dense<0.000000e+00> : vector<8x128xf32>
    %115 = tpu.matmul %108, %109, %cst_37 {dimension_numbers = #tpu.dot_dimension_numbers<[1], [0], [0], [1], [0, 0, 1, 1], [], []>} : vector<8x256xf32>, vector<256x128xf32>, vector<8x128xf32> -> vector<8x128xf32>
    %116 = vector.broadcast %110 : vector<1x128xf32> to vector<8x128xf32>
    %117 = arith.addf %115, %116 : vector<8x128xf32>
    %cst_38 = arith.constant 0.000000e+00 : f32
    %118 = vector.broadcast %cst_38 : f32 to vector<8x128xf32>
    %119 = arith.maximumf %117, %118 : vector<8x128xf32>
    %cst_39 = arith.constant dense<0.000000e+00> : vector<8x128xf32>
    %120 = tpu.matmul %119, %111, %cst_39 {dimension_numbers = #tpu.dot_dimension_numbers<[1], [0], [0], [1], [0, 0, 1, 1], [], []>} : vector<8x128xf32>, vector<128x128xf32>, vector<8x128xf32> -> vector<8x128xf32>
    %121 = vector.broadcast %112 : vector<1x128xf32> to vector<8x128xf32>
    %122 = arith.addf %120, %121 : vector<8x128xf32>
    %cst_40 = arith.constant dense<0.000000e+00> : vector<8x128xf32>
    %123 = tpu.matmul %122, %113, %cst_40 {dimension_numbers = #tpu.dot_dimension_numbers<[1], [0], [0], [1], [0, 0, 1, 1], [], []>} : vector<8x128xf32>, vector<128x128xf32>, vector<8x128xf32> -> vector<8x128xf32>
    %124 = vector.broadcast %114 : vector<1x128xf32> to vector<8x128xf32>
    %125 = arith.addf %123, %124 : vector<8x128xf32>
    %126 = vector.extract_strided_slice %122 {offsets = [0, 0], sizes = [2, 128], strides = [1, 1]} : vector<8x128xf32> to vector<2x128xf32>
    %c0_41 = arith.constant 0 : index
    %c0_42 = arith.constant 0 : index
    %127 = vector.load %arg9[%c0_41, %c0_42] : memref<2x128xf32, #tpu.memory_space<vmem>>, vector<2x128xf32>
    tpu.vector_store %arg9[%c0_41, %c0_42], %126 {strides = array<i32>} : memref<2x128xf32, #tpu.memory_space<vmem>>, vector<2x128xf32>,
    %128 = vector.extract_strided_slice %122 {offsets = [2, 0], sizes = [2, 128], strides = [1, 1]} : vector<8x128xf32> to vector<2x128xf32>
    %c0_43 = arith.constant 0 : index
    %c0_44 = arith.constant 0 : index
    %129 = vector.load %arg10[%c0_43, %c0_44] : memref<2x128xf32, #tpu.memory_space<vmem>>, vector<2x128xf32>
    tpu.vector_store %arg10[%c0_43, %c0_44], %128 {strides = array<i32>} : memref<2x128xf32, #tpu.memory_space<vmem>>, vector<2x128xf32>,
    %130 = vector.extract_strided_slice %125 {offsets = [0, 0], sizes = [2, 128], strides = [1, 1]} : vector<8x128xf32> to vector<2x128xf32>
    %c0_45 = arith.constant 0 : index
    %c0_46 = arith.constant 0 : index
    %131 = vector.load %arg7[%c0_45, %c0_46] : memref<2x128xf32, #tpu.memory_space<vmem>>, vector<2x128xf32>
    tpu.vector_store %arg7[%c0_45, %c0_46], %130 {strides = array<i32>} : memref<2x128xf32, #tpu.memory_space<vmem>>, vector<2x128xf32>,
    %132 = vector.extract_strided_slice %125 {offsets = [2, 0], sizes = [2, 128], strides = [1, 1]} : vector<8x128xf32> to vector<2x128xf32>
    %c0_47 = arith.constant 0 : index
    %c0_48 = arith.constant 0 : index
    %133 = vector.load %arg8[%c0_47, %c0_48] : memref<2x128xf32, #tpu.memory_space<vmem>>, vector<2x128xf32>
    tpu.vector_store %arg8[%c0_47, %c0_48], %132 {strides = array<i32>} : memref<2x128xf32, #tpu.memory_space<vmem>>, vector<2x128xf32>,
    return
  }
}

</mosaic_0001>

<llo_original>
// kernel: dscmr_forward.1
$region0: #{dscmr_forward.1}
  #allocation0 [shape = 'u32[]', space=smem, size = 0x4, offset = 0x4, fixed_abs, tag = 'smem constant byte address 0x4 - core index']
  #allocation1 [shape = 'u32[144,128]{1,0:T(1,128)}', space=vmem, size = 0x12000, scoped, tag = 'internal scratch']
  %s0 = inlined_call_operand.vmem [shape: f32[2,12,256], index: 0, kind: input, shape index: {}]
  %s1 = inlined_call_operand.vmem [shape: f32[256,128], index: 1, kind: input, shape index: {}]
  %s2 = inlined_call_operand.vmem [shape: f32[1,128], index: 2, kind: input, shape index: {}]
  %s3 = inlined_call_operand.vmem [shape: f32[128,128], index: 3, kind: input, shape index: {}]
  %s4 = inlined_call_operand.vmem [shape: f32[1,128], index: 4, kind: input, shape index: {}]
  %s5 = inlined_call_operand.vmem [shape: f32[128,128], index: 5, kind: input, shape index: {}]
  %s6 = inlined_call_operand.vmem [shape: f32[1,128], index: 6, kind: input, shape index: {}]
  %s7 = inlined_call_operand.hbm [shape: f32[2,128], index: 7, kind: output, shape index: {0}]
  %s8 = inlined_call_operand.hbm [shape: f32[2,128], index: 8, kind: output, shape index: {1}]
  %s9 = inlined_call_operand.hbm [shape: f32[2,128], index: 9, kind: output, shape index: {2}]
  %s10 = inlined_call_operand.hbm [shape: f32[2,128], index: 10, kind: output, shape index: {3}]
  %11 = xla_tuple %s7, %s8, %s9, %s10
  %s12 = sld [smem:[#allocation0]]
  $region62: #{dscmr_forward.1} parent=0
    _
  %s14 = ssub.s32 1, %s12
  %s15 = scalar_select 0, %s14, %s12
  $region1: #{dscmr_forward.1} parent=0
    #allocation2 [shape = 'u8[1024]{0}', space=vmem, size = 0x400, scoped, tag = 'output window, operand 0, single buffered']
    #allocation3 [shape = 's32[1]{0}', space=sflag, size = 0x4, scoped, tag = 'scoped memory for dscmr_forward.1']
    #allocation4 [shape = 'u8[1024]{0}', space=vmem, size = 0x400, scoped, tag = 'output window, operand 1, single buffered']
    #allocation5 [shape = 's32[1]{0}', space=sflag, size = 0x4, scoped, tag = 'scoped memory for dscmr_forward.1']
    #allocation6 [shape = 'u8[1024]{0}', space=vmem, size = 0x400, scoped, tag = 'output window, operand 2, single buffered']
    #allocation7 [shape = 'u8[1024]{0}', space=vmem, size = 0x400, scoped, tag = 'output window, operand 3, single buffered']
    #allocation8 [shape = 's32[1]{0}', space=sflag, size = 0x4, scoped, tag = 'scoped memory for dscmr_forward.1']
    %16 = vsyncpa [#allocation3], 0
    %17 = vsyncpa [#allocation5], 0
    %18 = vsyncpa [#allocation8], 0
    // Predicated region
    $region2: #{dscmr_forward.1} parent=1 // pred_check
      _
    $region3: #{dscmr_forward.1} parent=1 // pred_check_branch
      %20 = sbr.rel (0) target = $region5
    $region4: #{dscmr_forward.1} parent=1 // pred_region
      _
    $region5: #{dscmr_forward.1} parent=1 // pred_fallthru
      _
    // Predicated region
    $region6: #{dscmr_forward.1} parent=1 // pred_check
      _
    $region7: #{dscmr_forward.1} parent=1 // pred_check_branch
      %22 = sbr.rel (0) target = $region9
    $region8: #{dscmr_forward.1} parent=1 // pred_region
      _
    $region9: #{dscmr_forward.1} parent=1 // pred_fallthru
      _
    // Predicated region
    $region10: #{dscmr_forward.1} parent=1 // pred_check
      _
    $region11: #{dscmr_forward.1} parent=1 // pred_check_branch
      %24 = sbr.rel (0) target = $region13
    $region12: #{dscmr_forward.1} parent=1 // pred_region
      _
    $region13: #{dscmr_forward.1} parent=1 // pred_fallthru
      _
    // Predicated region
    $region14: #{dscmr_forward.1} parent=1 // pred_check
      _
    $region15: #{dscmr_forward.1} parent=1 // pred_check_branch
      %26 = sbr.rel (0) target = $region17
    $region16: #{dscmr_forward.1} parent=1 // pred_region
      _
    $region17: #{dscmr_forward.1} parent=1 // pred_fallthru
      _
    // Predicated region
    $region18: #{dscmr_forward.1} parent=1 // pred_check
      _
    $region19: #{dscmr_forward.1} parent=1 // pred_check_branch
      %28 = sbr.rel (0) target = $region21
    $region20: #{dscmr_forward.1} parent=1 // pred_region
      _
    $region21: #{dscmr_forward.1} parent=1 // pred_fallthru
      _
    // Predicated region
    $region22: #{dscmr_forward.1} parent=1 // pred_check
      _
    $region23: #{dscmr_forward.1} parent=1 // pred_check_branch
      %30 = sbr.rel (0) target = $region25
    $region24: #{dscmr_forward.1} parent=1 // pred_region
      _
    $region25: #{dscmr_forward.1} parent=1 // pred_fallthru
      _
    // Predicated region
    $region26: #{dscmr_forward.1} parent=1 // pred_check
      _
    $region27: #{dscmr_forward.1} parent=1 // pred_check_branch
      %32 = sbr.rel (0) target = $region29
    $region28: #{dscmr_forward.1} parent=1 // pred_region
      _
    $region29: #{dscmr_forward.1} parent=1 // pred_fallthru
      _
    %v33 = vld [vmem:[%s0] ss:$8 sm:$0x3]
    %s34 = scalar_lea.vmem %s0, 32
    %v35 = vld [vmem:[%s34] ss:$8 sm:$0x3]
    %v36 = vmin.f32 %v33, -inf
    %v37 = vmin.f32 %v35, -inf
    %v38 = vmin.f32 %v36, -inf
    %v39 = vmin.f32 %v37, -inf
    %v40 = vmin.f32 %v38, -inf
    %v41 = vmin.f32 %v39, -inf
    %s42 = scalar_lea.vmem %s0, 1
    %v43 = vld [vmem:[%s42] ss:$8 sm:$0x3]
    %s44 = scalar_lea.vmem %s0, 33
    %v45 = vld [vmem:[%s44] ss:$8 sm:$0x3]
    %v46 = vmax.f32 %v33, %v43
    %v47 = vmax.f32 %v35, %v45
    %v48 = vmin.f32 %v33, %v43
    %v49 = vmin.f32 %v35, %v45
    %v50 = vmax.f32 %v36, %v48
    %v51 = vmax.f32 %v37, %v49
    %v52 = vmin.f32 %v36, %v48
    %v53 = vmin.f32 %v37, %v49
    %v54 = vmax.f32 %v38, %v52
    %v55 = vmax.f32 %v39, %v53
    %v56 = vmin.f32 %v38, %v52
    %v57 = vmin.f32 %v39, %v53
    %v58 = vmax.f32 %v40, %v56
    %v59 = vmax.f32 %v41, %v57
    %s60 = scalar_lea.vmem %s0, 2
    %v61 = vld [vmem:[%s60] ss:$8 sm:$0x3]
    %s62 = scalar_lea.vmem %s0, 34
    %v63 = vld [vmem:[%s62] ss:$8 sm:$0x3]
    %v64 = vmax.f32 %v46, %v61
    %v65 = vmax.f32 %v47, %v63
    %v66 = vmin.f32 %v46, %v61
    %v67 = vmin.f32 %v47, %v63
    %v68 = vmax.f32 %v50, %v66
    %v69 = vmax.f32 %v51, %v67
    %v70 = vmin.f32 %v50, %v66
    %v71 = vmin.f32 %v51, %v67
    %v72 = vmax.f32 %v54, %v70
    %v73 = vmax.f32 %v55, %v71
    %v74 = vmin.f32 %v54, %v70
    %v75 = vmin.f32 %v55, %v71
    %v76 = vmax.f32 %v58, %v74
    %v77 = vmax.f32 %v59, %v75
    %s78 = scalar_lea.vmem %s0, 3
    %v79 = vld [vmem:[%s78] ss:$8 sm:$0x3]
    %s80 = scalar_lea.vmem %s0, 35
    %v81 = vld [vmem:[%s80] ss:$8 sm:$0x3]
    %v82 = vmax.f32 %v64, %v79
    %v83 = vmax.f32 %v65, %v81
    %v84 = vmin.f32 %v64, %v79
    %v85 = vmin.f32 %v65, %v81
    %v86 = vmax.f32 %v68, %v84
    %v87 = vmax.f32 %v69, %v85
    %v88 = vmin.f32 %v68, %v84
    %v89 = vmin.f32 %v69, %v85
    %v90 = vmax.f32 %v72, %v88
    %v91 = vmax.f32 %v73, %v89
    %v92 = vmin.f32 %v72, %v88
    %v93 = vmin.f32 %v73, %v89
    %v94 = vmax.f32 %v76, %v92
    %v95 = vmax.f32 %v77, %v93
    %s96 = scalar_lea.vmem %s0, 4
    %v97 = vld [vmem:[%s96] ss:$8 sm:$0x3]
    %s98 = scalar_lea.vmem %s0, 36
    %v99 = vld [vmem:[%s98] ss:$8 sm:$0x3]
    %v100 = vmax.f32 %v82, %v97
    %v101 = vmax.f32 %v83, %v99
    %v102 = vmin.f32 %v82, %v97
    %v103 = vmin.f32 %v83, %v99
    %v104 = vmax.f32 %v86, %v102
    %v105 = vmax.f32 %v87, %v103
    %v106 = vmin.f32 %v86, %v102
    %v107 = vmin.f32 %v87, %v103
    %v108 = vmax.f32 %v90, %v106
    %v109 = vmax.f32 %v91, %v107
    %v110 = vmin.f32 %v90, %v106
    %v111 = vmin.f32 %v91, %v107
    %v112 = vmax.f32 %v94, %v110
    %v113 = vmax.f32 %v95, %v111
    %s114 = scalar_lea.vmem %s0, 5
    %v115 = vld [vmem:[%s114] ss:$8 sm:$0x3]
    %s116 = scalar_lea.vmem %s0, 37
    %v117 = vld [vmem:[%s116] ss:$8 sm:$0x3]
    %v118 = vmax.f32 %v100, %v115
    %v119 = vmax.f32 %v101, %v117
    %v120 = vmin.f32 %v100, %v115
    %v121 = vmin.f32 %v101, %v117
    %v122 = vmax.f32 %v104, %v120
    %v123 = vmax.f32 %v105, %v121
    %v124 = vmin.f32 %v104, %v120
    %v125 = vmin.f32 %v105, %v121
    %v126 = vmax.f32 %v108, %v124
    %v127 = vmax.f32 %v109, %v125
    %v128 = vmin.f32 %v108, %v124
    %v129 = vmin.f32 %v109, %v125
    %v130 = vmax.f32 %v112, %v128
    %v131 = vmax.f32 %v113, %v129
    %s132 = scalar_lea.vmem %s0, 6
    %v133 = vld [vmem:[%s132] ss:$8 sm:$0x3]
    %s134 = scalar_lea.vmem %s0, 38
    %v135 = vld [vmem:[%s134] ss:$8 sm:$0x3]
    %v136 = vmax.f32 %v118, %v133
    %v137 = vmax.f32 %v119, %v135
    %v138 = vmin.f32 %v118, %v133
    %v139 = vmin.f32 %v119, %v135
    %v140 = vmax.f32 %v122, %v138
    %v141 = vmax.f32 %v123, %v139
    %v142 = vmin.f32 %v122, %v138
    %v143 = vmin.f32 %v123, %v139
    %v144 = vmax.f32 %v126, %v142
    %v145 = vmax.f32 %v127, %v143
    %v146 = vmin.f32 %v126, %v142
    %v147 = vmin.f32 %v127, %v143
    %v148 = vmax.f32 %v130, %v146
    %v149 = vmax.f32 %v131, %v147
    %s150 = scalar_lea.vmem %s0, 7
    %v151 = vld [vmem:[%s150] ss:$8 sm:$0x3]
    %s152 = scalar_lea.vmem %s0, 39
    %v153 = vld [vmem:[%s152] ss:$8 sm:$0x3]
    %v154 = vmax.f32 %v136, %v151
    %v155 = vmax.f32 %v137, %v153
    %v156 = vmin.f32 %v136, %v151
    %v157 = vmin.f32 %v137, %v153
    %v158 = vmax.f32 %v140, %v156
    %v159 = vmax.f32 %v141, %v157
    %v160 = vmin.f32 %v140, %v156
    %v161 = vmin.f32 %v141, %v157
    %v162 = vmax.f32 %v144, %v160
    %v163 = vmax.f32 %v145, %v161
    %v164 = vmin.f32 %v144, %v160
    %v165 = vmin.f32 %v145, %v161
    %v166 = vmax.f32 %v148, %v164
    %v167 = vmax.f32 %v149, %v165
    %s168 = scalar_lea.vmem %s0, 16
    %v169 = vld [vmem:[%s168] ss:$8 sm:$0x3]
    %s170 = scalar_lea.vmem %s0, 48
    %v171 = vld [vmem:[%s170] ss:$8 sm:$0x3]
    %v172 = vmax.f32 %v154, %v169
    %v173 = vmax.f32 %v155, %v171
    %v174 = vmin.f32 %v154, %v169
    %v175 = vmin.f32 %v155, %v171
    %v176 = vmax.f32 %v158, %v174
    %v177 = vmax.f32 %v159, %v175
    %v178 = vmin.f32 %v158, %v174
    %v179 = vmin.f32 %v159, %v175
    %v180 = vmax.f32 %v162, %v178
    %v181 = vmax.f32 %v163, %v179
    %v182 = vmin.f32 %v162, %v178
    %v183 = vmin.f32 %v163, %v179
    %v184 = vmax.f32 %v166, %v182
    %v185 = vmax.f32 %v167, %v183
    %s186 = scalar_lea.vmem %s0, 17
    %v187 = vld [vmem:[%s186] ss:$8 sm:$0x3]
    %s188 = scalar_lea.vmem %s0, 49
    %v189 = vld [vmem:[%s188] ss:$8 sm:$0x3]
    %v190 = vmax.f32 %v172, %v187
    %v191 = vmax.f32 %v173, %v189
    %v192 = vmin.f32 %v172, %v187
    %v193 = vmin.f32 %v173, %v189
    %v194 = vmax.f32 %v176, %v192
    %v195 = vmax.f32 %v177, %v193
    %v196 = vmin.f32 %v176, %v192
    %v197 = vmin.f32 %v177, %v193
    %v198 = vmax.f32 %v180, %v196
    %v199 = vmax.f32 %v181, %v197
    %v200 = vmin.f32 %v180, %v196
    %v201 = vmin.f32 %v181, %v197
    %v202 = vmax.f32 %v184, %v200
    %v203 = vmax.f32 %v185, %v201
    %s204 = scalar_lea.vmem %s0, 18
    %v205 = vld [vmem:[%s204] ss:$8 sm:$0x3]
    %s206 = scalar_lea.vmem %s0, 50
    %v207 = vld [vmem:[%s206] ss:$8 sm:$0x3]
    %v208 = vmax.f32 %v190, %v205
    %v209 = vmax.f32 %v191, %v207
    %v210 = vmin.f32 %v190, %v205
    %v211 = vmin.f32 %v191, %v207
    %v212 = vmax.f32 %v194, %v210
    %v213 = vmax.f32 %v195, %v211
    %v214 = vmin.f32 %v194, %v210
    %v215 = vmin.f32 %v195, %v211
    %v216 = vmax.f32 %v198, %v214
    %v217 = vmax.f32 %v199, %v215
    %v218 = vmin.f32 %v198, %v214
    %v219 = vmin.f32 %v199, %v215
    %v220 = vmax.f32 %v202, %v218
    %v221 = vmax.f32 %v203, %v219
    %s222 = scalar_lea.vmem %s0, 19
    %v223 = vld [vmem:[%s222] ss:$8 sm:$0x3]
    %s224 = scalar_lea.vmem %s0, 51
    %v225 = vld [vmem:[%s224] ss:$8 sm:$0x3]
    %v226 = vmin.f32 %v208, %v223
    %v227 = vmin.f32 %v209, %v225
    %v228 = vmax.f32 %v212, %v226
    %v229 = vmax.f32 %v213, %v227
    %v230 = vmin.f32 %v212, %v226
    %v231 = vmin.f32 %v213, %v227
    %v232 = vmin.f32 %v216, %v230
    %v233 = vmin.f32 %v217, %v231
    %v234 = vmax.f32 %v220, %v232
    %v235 = vmax.f32 %v221, %v233
    %v238 = vcombine.low %v228, %v229
    %v240 = vunpack.c.l.s4 1966171168
    %v241 = vunpack.c.0.s8 %v240
    %v242 = vlaneseq
    %v243 = vshrl.u32 %v242, 7
    %v244 = vsub.s32 %v241, %v243
    %v245 = vrot.slane %v238, %v244
    %v246 = vcombine.high %v245, %v245
    %v248 = vunpack.c.l.s4 1966171168
    %v249 = vunpack.c.0.s8 %v248
    %v250 = vlaneseq
    %v251 = vshrl.u32 %v250, 7
    %v252 = vsub.s32 %v249, %v251
    %v253 = vrot.slane %v245, %v252
    %v255 = vunpack.c.l.s4 1966171168
    %v256 = vunpack.c.0.s8 %v255
    %v257 = vlaneseq
    %v258 = vshrl.u32 %v257, 7
    %v259 = vsub.s32 %v256, %v258
    %v260 = vrot.slane %v246, %v259
    %v265 = vcombine.low %v234, %v235
    %v267 = vunpack.c.l.s4 1966171168
    %v268 = vunpack.c.0.s8 %v267
    %v269 = vlaneseq
    %v270 = vshrl.u32 %v269, 7
    %v271 = vsub.s32 %v268, %v270
    %v272 = vrot.slane %v265, %v271
    %v273 = vcombine.low %v272, %v272
    %v275 = vunpack.c.l.s4 1966171168
    %v276 = vunpack.c.0.s8 %v275
    %v277 = vlaneseq
    %v278 = vshrl.u32 %v277, 7
    %v279 = vsub.s32 %v276, %v278
    %v280 = vrot.slane %v273, %v279
    %v282 = vunpack.c.l.s4 1966171168
    %v283 = vunpack.c.0.s8 %v282
    %v284 = vlaneseq
    %v285 = vshrl.u32 %v284, 7
    %v286 = vsub.s32 %v283, %v285
    %v287 = vrot.slane %v272, %v286
    %vm290 = vcmask 1041408
    %v291 = vsel %vm290, %v253, %v280
    %v292 = vsel %vm290, %v260, %v287
    %vm293 = vcmask 1043456
    %v294 = vsel %vm293, %v291, 0.0
    %v295 = vsel %vm293, %v292, 0.0
    %v296 = vld [vmem:[%s1] sm:$0xff]
    %v297 = vld [vmem:[%s1 + $0x8] sm:$0xff]
    %v298 = vld [vmem:[%s1 + $0x10] sm:$0xff]
    %v299 = vld [vmem:[%s1 + $0x18] sm:$0xff]
    %v300 = vld [vmem:[%s1 + $0x20] sm:$0xff]
    %v301 = vld [vmem:[%s1 + $0x28] sm:$0xff]
    %v302 = vld [vmem:[%s1 + $0x30] sm:$0xff]
    %v303 = vld [vmem:[%s1 + $0x38] sm:$0xff]
    %v304 = vld [vmem:[%s1 + $0x40] sm:$0xff]
    %v305 = vld [vmem:[%s1 + $0x48] sm:$0xff]
    %v306 = vld [vmem:[%s1 + $0x50] sm:$0xff]
    %v307 = vld [vmem:[%s1 + $0x58] sm:$0xff]
    %v308 = vld [vmem:[%s1 + $0x60] sm:$0xff]
    %v309 = vld [vmem:[%s1 + $0x68] sm:$0xff]
    %v310 = vld [vmem:[%s1 + $0x70] sm:$0xff]
    %v311 = vld [vmem:[%s1 + $0x78] sm:$0xff]
    %v312 = vld [vmem:[%s1 + $0x80] sm:$0xff]
    %v313 = vld [vmem:[%s1 + $0x88] sm:$0xff]
    %v314 = vld [vmem:[%s1 + $0x90] sm:$0xff]
    %v315 = vld [vmem:[%s1 + $0x98] sm:$0xff]
    %v316 = vld [vmem:[%s1 + $0xa0] sm:$0xff]
    %v317 = vld [vmem:[%s1 + $0xa8] sm:$0xff]
    %v318 = vld [vmem:[%s1 + $0xb0] sm:$0xff]
    %v319 = vld [vmem:[%s1 + $0xb8] sm:$0xff]
    %v320 = vld [vmem:[%s1 + $0xc0] sm:$0xff]
    %v321 = vld [vmem:[%s1 + $0xc8] sm:$0xff]
    %v322 = vld [vmem:[%s1 + $0xd0] sm:$0xff]
    %v323 = vld [vmem:[%s1 + $0xd8] sm:$0xff]
    %v324 = vld [vmem:[%s1 + $0xe0] sm:$0xff]
    %v325 = vld [vmem:[%s1 + $0xe8] sm:$0xff]
    %v326 = vld [vmem:[%s1 + $0xf0] sm:$0xff]
    %v327 = vld [vmem:[%s1 + $0xf8] sm:$0xff]
    %v328 = vld [vmem:[%s2] sm:$0x1]
    %v329 = vld [vmem:[%s3] sm:$0xff]
    %v330 = vld [vmem:[%s3 + $0x8] sm:$0xff]
    %v331 = vld [vmem:[%s3 + $0x10] sm:$0xff]
    %v332 = vld [vmem:[%s3 + $0x18] sm:$0xff]
    %v333 = vld [vmem:[%s3 + $0x20] sm:$0xff]
    %v334 = vld [vmem:[%s3 + $0x28] sm:$0xff]
    %v335 = vld [vmem:[%s3 + $0x30] sm:$0xff]
    %v336 = vld [vmem:[%s3 + $0x38] sm:$0xff]
    %v337 = vld [vmem:[%s3 + $0x40] sm:$0xff]
    %v338 = vld [vmem:[%s3 + $0x48] sm:$0xff]
    %v339 = vld [vmem:[%s3 + $0x50] sm:$0xff]
    %v340 = vld [vmem:[%s3 + $0x58] sm:$0xff]
    %v341 = vld [vmem:[%s3 + $0x60] sm:$0xff]
    %v342 = vld [vmem:[%s3 + $0x68] sm:$0xff]
    %v343 = vld [vmem:[%s3 + $0x70] sm:$0xff]
    %v344 = vld [vmem:[%s3 + $0x78] sm:$0xff]
    %v345 = vld [vmem:[%s4] sm:$0x1]
    %v346 = vld [vmem:[%s5] sm:$0xff]
    %v347 = vld [vmem:[%s5 + $0x8] sm:$0xff]
    %v348 = vld [vmem:[%s5 + $0x10] sm:$0xff]
    %v349 = vld [vmem:[%s5 + $0x18] sm:$0xff]
    %v350 = vld [vmem:[%s5 + $0x20] sm:$0xff]
    %v351 = vld [vmem:[%s5 + $0x28] sm:$0xff]
    %v352 = vld [vmem:[%s5 + $0x30] sm:$0xff]
    %v353 = vld [vmem:[%s5 + $0x38] sm:$0xff]
    %v354 = vld [vmem:[%s5 + $0x40] sm:$0xff]
    %v355 = vld [vmem:[%s5 + $0x48] sm:$0xff]
    %v356 = vld [vmem:[%s5 + $0x50] sm:$0xff]
    %v357 = vld [vmem:[%s5 + $0x58] sm:$0xff]
    %v358 = vld [vmem:[%s5 + $0x60] sm:$0xff]
    %v359 = vld [vmem:[%s5 + $0x68] sm:$0xff]
    %v360 = vld [vmem:[%s5 + $0x70] sm:$0xff]
    %v361 = vld [vmem:[%s5 + $0x78] sm:$0xff]
    %v362 = vld [vmem:[%s6] sm:$0x1]
    %v364 = vlaneseq
    %v365 = vshrl.u32 %v364, 7
    %v366 = vsub.s32 0, %v365
    %v367 = vrot.slane %v328, %v366
    %369 = vmatprep.subr.mxu0 0.0
    %370 = vmatpush1.msra.mxu0 %v296
    %371 = vmatprep.subr.mxu0 0.0
    %372 = vmatpush1.msra.mxu0 %v297
    %373 = vmatprep.subr.mxu0 0.0
    %374 = vmatpush1.msra.mxu0 %v298
    %375 = vmatprep.subr.mxu0 0.0
    %376 = vmatpush1.msra.mxu0 %v299
    %377 = vmatprep.subr.mxu0 0.0
    %378 = vmatpush1.msra.mxu0 %v300
    %379 = vmatprep.subr.mxu0 0.0
    %380 = vmatpush1.msra.mxu0 %v301
    %381 = vmatprep.subr.mxu0 0.0
    %382 = vmatpush1.msra.mxu0 %v302
    %383 = vmatprep.subr.mxu0 0.0
    %384 = vmatpush1.msra.mxu0 %v303
    %385 = vmatprep.subr.mxu0 0.0
    %386 = vmatpush1.msra.mxu0 %v304
    %387 = vmatprep.subr.mxu0 0.0
    %388 = vmatpush1.msra.mxu0 %v305
    %389 = vmatprep.subr.mxu0 0.0
    %390 = vmatpush1.msra.mxu0 %v306
    %391 = vmatprep.subr.mxu0 0.0
    %392 = vmatpush1.msra.mxu0 %v307
    %393 = vmatprep.subr.mxu0 0.0
    %394 = vmatpush1.msra.mxu0 %v308
    %395 = vmatprep.subr.mxu0 0.0
    %396 = vmatpush1.msra.mxu0 %v309
    %397 = vmatprep.subr.mxu0 0.0
    %398 = vmatpush1.msra.mxu0 %v310
    %399 = vmatprep.subr.mxu0 0.0
    %400 = vmatpush1.msra.mxu0 %v311
    %401 = vmatprep.subr.mxu0 0.0
    %402 = vmatpush1.msra.mxu0 %v312
    %403 = vmatprep.subr.mxu0 0.0
    %404 = vmatpush1.msra.mxu0 %v313
    %405 = vmatprep.subr.mxu0 0.0
    %406 = vmatpush1.msra.mxu0 %v314
    %407 = vmatprep.subr.mxu0 0.0
    %408 = vmatpush1.msra.mxu0 %v315
    %409 = vmatprep.subr.mxu0 0.0
    %410 = vmatpush1.msra.mxu0 %v316
    %411 = vmatprep.subr.mxu0 0.0
    %412 = vmatpush1.msra.mxu0 %v317
    %413 = vmatprep.subr.mxu0 0.0
    %414 = vmatpush1.msra.mxu0 %v318
    %415 = vmatprep.subr.mxu0 0.0
    %416 = vmatpush1.msra.mxu0 %v319
    %417 = vmatprep.subr.mxu0 0.0
    %418 = vmatpush1.msra.mxu0 %v320
    %419 = vmatprep.subr.mxu0 0.0
    %420 = vmatpush1.msra.mxu0 %v321
    %421 = vmatprep.subr.mxu0 0.0
    %422 = vmatpush1.msra.mxu0 %v322
    %423 = vmatprep.subr.mxu0 0.0
    %424 = vmatpush1.msra.mxu0 %v323
    %425 = vmatprep.subr.mxu0 0.0
    %426 = vmatpush1.msra.mxu0 %v324
    %427 = vmatprep.subr.mxu0 0.0
    %428 = vmatpush1.msra.mxu0 %v325
    %429 = vmatprep.subr.mxu0 0.0
    %430 = vmatpush1.msra.mxu0 %v326
    %431 = vmatprep.subr.mxu0 0.0
    %432 = vmatpush1.msra.mxu0 %v327
    %433 = vmatprep.mubr.f32.mxu0 %v295
    %434 = vmatmul.mubr.f32.gmra.mrb[0].mxu0 %v294
    %v435 = vpop.f32.mrb[0].mxu0
    %v436 = vadd.f32 %v367, %v435
    %v437 = vpop.f32.mrb[0].mxu0
    %438 = vdwg.mxu0
    %v439 = vmax.f32 %v436, 0.0
    %v441 = vlaneseq
    %v442 = vshrl.u32 %v441, 7
    %v443 = vsub.s32 0, %v442
    %v444 = vrot.slane %v345, %v443
    %446 = vmatprep.subr.mxu0 0.0
    %447 = vmatpush1.msra.mxu0 %v329
    %448 = vmatprep.subr.mxu0 0.0
    %449 = vmatpush1.msra.mxu0 %v330
    %450 = vmatprep.subr.mxu0 0.0
    %451 = vmatpush1.msra.mxu0 %v331
    %452 = vmatprep.subr.mxu0 0.0
    %453 = vmatpush1.msra.mxu0 %v332
    %454 = vmatprep.subr.mxu0 0.0
    %455 = vmatpush1.msra.mxu0 %v333
    %456 = vmatprep.subr.mxu0 0.0
    %457 = vmatpush1.msra.mxu0 %v334
    %458 = vmatprep.subr.mxu0 0.0
    %459 = vmatpush1.msra.mxu0 %v335
    %460 = vmatprep.subr.mxu0 0.0
    %461 = vmatpush1.msra.mxu0 %v336
    %462 = vmatprep.subr.mxu0 0.0
    %463 = vmatpush1.msra.mxu0 %v337
    %464 = vmatprep.subr.mxu0 0.0
    %465 = vmatpush1.msra.mxu0 %v338
    %466 = vmatprep.subr.mxu0 0.0
    %467 = vmatpush1.msra.mxu0 %v339
    %468 = vmatprep.subr.mxu0 0.0
    %469 = vmatpush1.msra.mxu0 %v340
    %470 = vmatprep.subr.mxu0 0.0
    %471 = vmatpush1.msra.mxu0 %v341
    %472 = vmatprep.subr.mxu0 0.0
    %473 = vmatpush1.msra.mxu0 %v342
    %474 = vmatprep.subr.mxu0 0.0
    %475 = vmatpush1.msra.mxu0 %v343
    %476 = vmatprep.subr.mxu0 0.0
    %477 = vmatpush1.msra.mxu0 %v344
    %478 = vmatprep.subr.mxu0 0.0
    %479 = vmatpush1.msra.mxu0 0.0
    %480 = vmatprep.subr.mxu0 0.0
    %481 = vmatpush1.msra.mxu0 0.0
    %482 = vmatprep.subr.mxu0 0.0
    %483 = vmatpush1.msra.mxu0 0.0
    %484 = vmatprep.subr.mxu0 0.0
    %485 = vmatpush1.msra.mxu0 0.0
    %486 = vmatprep.subr.mxu0 0.0
    %487 = vmatpush1.msra.mxu0 0.0
    %488 = vmatprep.subr.mxu0 0.0
    %489 = vmatpush1.msra.mxu0 0.0
    %490 = vmatprep.subr.mxu0 0.0
    %491 = vmatpush1.msra.mxu0 0.0
    %492 = vmatprep.subr.mxu0 0.0
    %493 = vmatpush1.msra.mxu0 0.0
    %494 = vmatprep.subr.mxu0 0.0
    %495 = vmatpush1.msra.mxu0 0.0
    %496 = vmatprep.subr.mxu0 0.0
    %497 = vmatpush1.msra.mxu0 0.0
    %498 = vmatprep.subr.mxu0 0.0
    %499 = vmatpush1.msra.mxu0 0.0
    %500 = vmatprep.subr.mxu0 0.0
    %501 = vmatpush1.msra.mxu0 0.0
    %502 = vmatprep.subr.mxu0 0.0
    %503 = vmatpush1.msra.mxu0 0.0
    %504 = vmatprep.subr.mxu0 0.0
    %505 = vmatpush1.msra.mxu0 0.0
    %506 = vmatprep.subr.mxu0 0.0
    %507 = vmatpush1.msra.mxu0 0.0
    %508 = vmatprep.subr.mxu0 0.0
    %509 = vmatpush1.msra.mxu0 0.0
    %510 = vmatprep.mubr.f32.mxu0 0.0
    %511 = vmatmul.mubr.f32.gmra.mrb[0].mxu0 %v439
    %v512 = vpop.f32.mrb[0].mxu0
    %v513 = vadd.f32 %v444, %v512
    %v514 = vpop.f32.mrb[0].mxu0
    %515 = vdwg.mxu0
    %v517 = vlaneseq
    %v518 = vshrl.u32 %v517, 7
    %v519 = vsub.s32 0, %v518
    %v520 = vrot.slane %v362, %v519
    %522 = vmatprep.subr.mxu0 0.0
    %523 = vmatpush1.msra.mxu0 %v346
    %524 = vmatprep.subr.mxu0 0.0
    %525 = vmatpush1.msra.mxu0 %v347
    %526 = vmatprep.subr.mxu0 0.0
    %527 = vmatpush1.msra.mxu0 %v348
    %528 = vmatprep.subr.mxu0 0.0
    %529 = vmatpush1.msra.mxu0 %v349
    %530 = vmatprep.subr.mxu0 0.0
    %531 = vmatpush1.msra.mxu0 %v350
    %532 = vmatprep.subr.mxu0 0.0
    %533 = vmatpush1.msra.mxu0 %v351
    %534 = vmatprep.subr.mxu0 0.0
    %535 = vmatpush1.msra.mxu0 %v352
    %536 = vmatprep.subr.mxu0 0.0
    %537 = vmatpush1.msra.mxu0 %v353
    %538 = vmatprep.subr.mxu0 0.0
    %539 = vmatpush1.msra.mxu0 %v354
    %540 = vmatprep.subr.mxu0 0.0
    %541 = vmatpush1.msra.mxu0 %v355
    %542 = vmatprep.subr.mxu0 0.0
    %543 = vmatpush1.msra.mxu0 %v356
    %544 = vmatprep.subr.mxu0 0.0
    %545 = vmatpush1.msra.mxu0 %v357
    %546 = vmatprep.subr.mxu0 0.0
    %547 = vmatpush1.msra.mxu0 %v358
    %548 = vmatprep.subr.mxu0 0.0
    %549 = vmatpush1.msra.mxu0 %v359
    %550 = vmatprep.subr.mxu0 0.0
    %551 = vmatpush1.msra.mxu0 %v360
    %552 = vmatprep.subr.mxu0 0.0
    %553 = vmatpush1.msra.mxu0 %v361
    %554 = vmatprep.subr.mxu0 0.0
    %555 = vmatpush1.msra.mxu0 0.0
    %556 = vmatprep.subr.mxu0 0.0
    %557 = vmatpush1.msra.mxu0 0.0
    %558 = vmatprep.subr.mxu0 0.0
    %559 = vmatpush1.msra.mxu0 0.0
    %560 = vmatprep.subr.mxu0 0.0
    %561 = vmatpush1.msra.mxu0 0.0
    %562 = vmatprep.subr.mxu0 0.0
    %563 = vmatpush1.msra.mxu0 0.0
    %564 = vmatprep.subr.mxu0 0.0
    %565 = vmatpush1.msra.mxu0 0.0
    %566 = vmatprep.subr.mxu0 0.0
    %567 = vmatpush1.msra.mxu0 0.0
    %568 = vmatprep.subr.mxu0 0.0
    %569 = vmatpush1.msra.mxu0 0.0
    %570 = vmatprep.subr.mxu0 0.0
    %571 = vmatpush1.msra.mxu0 0.0
    %572 = vmatprep.subr.mxu0 0.0
    %573 = vmatpush1.msra.mxu0 0.0
    %574 = vmatprep.subr.mxu0 0.0
    %575 = vmatpush1.msra.mxu0 0.0
    %576 = vmatprep.subr.mxu0 0.0
    %577 = vmatpush1.msra.mxu0 0.0
    %578 = vmatprep.subr.mxu0 0.0
    %579 = vmatpush1.msra.mxu0 0.0
    %580 = vmatprep.subr.mxu0 0.0
    %581 = vmatpush1.msra.mxu0 0.0
    %582 = vmatprep.subr.mxu0 0.0
    %583 = vmatpush1.msra.mxu0 0.0
    %584 = vmatprep.subr.mxu0 0.0
    %585 = vmatpush1.msra.mxu0 0.0
    %586 = vmatprep.mubr.f32.mxu0 0.0
    %587 = vmatmul.mubr.f32.gmra.mrb[0].mxu0 %v513
    %v588 = vpop.f32.mrb[0].mxu0
    %v589 = vadd.f32 %v520, %v588
    %v590 = vpop.f32.mrb[0].mxu0
    %591 = vdwg.mxu0
    %592 = vst [vmem:[#allocation6] sm:$0x3] %v513
    %593 = vst [vmem:[#allocation7 - $0x2] sm:$0xc] %v513
    %594 = vst [vmem:[#allocation2] sm:$0x3] %v589
    %595 = vst [vmem:[#allocation4 - $0x2] sm:$0xc] %v589
    // Predicated region
    $region30: #{dscmr_forward.1} parent=1 // pred_check
      _
    $region31: #{dscmr_forward.1} parent=1 // pred_check_branch
      %597 = sbr.rel (0) target = $region33
    $region32: #{dscmr_forward.1} parent=1 // pred_region
      %s599 = ssub.s32 32, 32
      %600 = vsyncadd [#allocation3], %s599
      %s602 = sshll.u32 [#allocation2], 4
      %s603 = int_to_ptr.vmem [resolvable:$true] %s602
      %605 = dma.vmem_to_hbm [thread:$0]  %s603, 32, %s7, [#allocation3]
    $region33: #{dscmr_forward.1} parent=1 // pred_fallthru
      _
    // Predicated region
    $region34: #{dscmr_forward.1} parent=1 // pred_check
      _
    $region35: #{dscmr_forward.1} parent=1 // pred_check_branch
      %607 = sbr.rel (0) target = $region37
    $region36: #{dscmr_forward.1} parent=1 // pred_region
      %s609 = ssub.s32 32, 32
      %610 = vsyncadd [#allocation5], %s609
      %s612 = sshll.u32 [#allocation4], 4
      %s613 = int_to_ptr.vmem [resolvable:$true] %s612
      %615 = dma.vmem_to_hbm [thread:$0]  %s613, 32, %s8, [#allocation5]
    $region37: #{dscmr_forward.1} parent=1 // pred_fallthru
      _
    // Predicated region
    $region38: #{dscmr_forward.1} parent=1 // pred_check
      _
    $region39: #{dscmr_forward.1} parent=1 // pred_check_branch
      %617 = sbr.rel (0) target = $region41
    $region40: #{dscmr_forward.1} parent=1 // pred_region
      %s619 = ssub.s32 32, 32
      %620 = vsyncadd [#allocation5], %s619
      %s622 = sshll.u32 [#allocation6], 4
      %s623 = int_to_ptr.vmem [resolvable:$true] %s622
      %625 = dma.vmem_to_hbm [thread:$0]  %s623, 32, %s9, [#allocation5]
    $region41: #{dscmr_forward.1} parent=1 // pred_fallthru
      _
    // Predicated region
    $region42: #{dscmr_forward.1} parent=1 // pred_check
      _
    $region43: #{dscmr_forward.1} parent=1 // pred_check_branch
      %627 = sbr.rel (0) target = $region45
    $region44: #{dscmr_forward.1} parent=1 // pred_region
      %s629 = ssub.s32 32, 32
      %630 = vsyncadd [#allocation8], %s629
      %s632 = sshll.u32 [#allocation7], 4
      %s633 = int_to_ptr.vmem [resolvable:$true] %s632
      %635 = dma.vmem_to_hbm [thread:$0]  %s633, 32, %s10, [#allocation8]
    $region45: #{dscmr_forward.1} parent=1 // pred_fallthru
      _
    // Predicated region
    $region46: #{dscmr_forward.1} parent=1 // pred_check
      _
    $region47: #{dscmr_forward.1} parent=1 // pred_check_branch
      %637 = sbr.rel (0) target = $region49
    $region48: #{dscmr_forward.1} parent=1 // pred_region
      %638 = dma.done [#allocation3], 32
    $region49: #{dscmr_forward.1} parent=1 // pred_fallthru
      _
    // Predicated region
    $region50: #{dscmr_forward.1} parent=1 // pred_check
      _
    $region51: #{dscmr_forward.1} parent=1 // pred_check_branch
      %640 = sbr.rel (0) target = $region53
    $region52: #{dscmr_forward.1} parent=1 // pred_region
      %641 = dma.done [#allocation5], 32
    $region53: #{dscmr_forward.1} parent=1 // pred_fallthru
      _
    // Predicated region
    $region54: #{dscmr_forward.1} parent=1 // pred_check
      _
    $region55: #{dscmr_forward.1} parent=1 // pred_check_branch
      %643 = sbr.rel (0) target = $region57
    $region56: #{dscmr_forward.1} parent=1 // pred_region
      %644 = dma.done [#allocation5], 32
    $region57: #{dscmr_forward.1} parent=1 // pred_fallthru
      _
    // Predicated region
    $region58: #{dscmr_forward.1} parent=1 // pred_check
      _
    $region59: #{dscmr_forward.1} parent=1 // pred_check_branch
      %646 = sbr.rel (0) target = $region61
    $region60: #{dscmr_forward.1} parent=1 // pred_region
      %647 = dma.done [#allocation8], 32
    $region61: #{dscmr_forward.1} parent=1 // pred_fallthru
      _
    %648 = vsyncpa [#allocation3], 1
    %649 = vsyncpa [#allocation5], 1
    %650 = vsyncpa [#allocation8], 1

</llo_original>
